<compile_context>
chip_gen: v6e
topology: v6e:2x2x1
jax: 0.10.0
libtpu: 0.0.40
codegen_flags: <defaults>
</compile_context>

<pallas_src>
import jax
import jax.numpy as jnp
from jax import lax
from jax.experimental import pallas as pl
from jax.experimental.pallas import tpu as pltpu

_K = 20                  # hard-coded k of torch.topk in the reference module
_BCE_CLAMP = 100.0       # PyTorch BCELoss clamps each -log term at 100
_RANK_PATH_MAX_T = 256   # gate for the O(T^2) rank-based top-k (VMEM-safe on v5e/v6e/v7x)


def _topk_mean_loop(v, k):
    """Large-T fallback: serial selection on packed sortable keys.

    v: (rows, T) float32 in [0, 1].  Returns (rows, 1) mean of the top-k.
    No loop-carried selection mask: selected lanes are overwritten with the
    INT32_MIN sentinel and the mask is recovered after the loop.
    NOTE: packing the lane index into the low bits quantizes the low mantissa
    bits, so selection among near-ties is approximate for very long T.
    """
    rows, t = v.shape
    col = lax.broadcasted_iota(jnp.int32, (rows, t), 1)
    ib = max((t - 1).bit_length(), 1)
    low_mask = (1 << ib) - 1
    bits = pltpu.bitcast(v, jnp.int32)
    key = jnp.where(bits >= 0, bits, bits ^ jnp.int32(0x7FFFFFFF))   # total order
    packed = jnp.bitwise_or(jnp.bitwise_and(key, jnp.int32(~low_mask)),
                            (t - 1) - col)                            # distinct, >= 0
    sentinel = jnp.full((rows, t), -2**31, dtype=jnp.int32)

    def body(_, pk):
        cur = jnp.max(pk, axis=-1, keepdims=True)     # one XLU reduce per step
        return jnp.where(pk == cur, sentinel, pk)     # exactly one lane per row

    pk = lax.fori_loop(0, k, body, packed, unroll=True)
    taken = (pk == jnp.int32(-2**31)).astype(jnp.float32)
    return jnp.sum(v * taken, axis=-1, keepdims=True) * (1.0 / k)


def _topk_stream_loss(v, eye, tie):
    """Mean over rows of BCE(target=1) on the per-row top-k mean of v (b, T).

    Rank/wins formulation: element j is in the top-k iff it beats >= T-k other
    elements.  `beats[i, j]` = "j beats i" = (v_j > v_i) or (v_j == v_i and
    j < i).  wins_j = sum_i beats[i, j] (sublane reduce).  Exactly k elements
    satisfy wins >= T - k, and ties do not change the selected-value sum.
    Returns a (1, 1) float32 array.
    """
    b, t = v.shape
    acc = None
    for r in range(b):                       # b is tiny and static
        vj = v[r:r + 1, :]                   # (1, T) values along lanes (exact)
        # (T, 1) copy of the row with values along sublanes, via an identity
        # matmul on the MXU (bit-exact at HIGHEST precision).
        vi = lax.dot_general(eye, vj, (((1,), (1,)), ((), ())),
                             preferred_element_type=jnp.float32,
                             precision=lax.Precision.HIGHEST)        # (T, 1)
        beats = jnp.logical_or(vj > vi,
                               jnp.logical_and(vj == vi, tie))        # (T, T)
        wins = jnp.sum(beats.astype(jnp.float32), axis=0, keepdims=True)  # (1, T)
        sel = (wins >= float(t - _K)).astype(jnp.float32)              # (1, T)
        mean_r = jnp.sum(vj * sel, axis=1, keepdims=True) * (1.0 / _K)  # (1, 1)
        term = jnp.minimum(-jnp.log(mean_r), _BCE_CLAMP)                # (1, 1)
        acc = term if acc is None else acc + term
    return acc * (1.0 / b)


def _ad_loss_kernel(a_ref, n_ref, an_ref, na_ref, seq_ref, out_ref):
    """Inputs (full-array VMEM blocks):
         a_ref  : (b, T) A_att    -- top-k stream, BCE target 1
         n_ref  : (b, T) N_att    -- masked stream, BCE target 1
         an_ref : (b, T) A_Natt   -- masked stream, BCE target 0
         na_ref : (b, T) N_Aatt   -- top-k stream on (1 - x), BCE target 1
         seq_ref: (b, 1) int32 valid lengths
       Output:
         out_ref: (1, 4) f32 = [panomaly_loss, A_loss, N_loss, A_Nloss]
    """
    b, t = a_ref.shape
    f32 = jnp.float32

    # In-kernel upcast: accepts bf16 inputs (halves DMA bytes); no-op for f32.
    a = a_ref[...].astype(f32)
    n = n_ref[...].astype(f32)
    an = an_ref[...].astype(f32)
    na = na_ref[...].astype(f32)

    # ----------------------------------------------------------- top-k terms
    if t <= _RANK_PATH_MAX_T:
        ii = lax.broadcasted_iota(jnp.int32, (t, t), 0)   # candidate index i
        jj = lax.broadcasted_iota(jnp.int32, (t, t), 1)   # competitor index j
        eye = (ii == jj).astype(f32)                      # identity for the MXU transpose
        tie = jj < ii                                     # tie-break: lower index wins
        a_loss = _topk_stream_loss(a, eye, tie)           # (1, 1)
        pano_loss = _topk_stream_loss(1.0 - na, eye, tie)
    else:
        am = _topk_mean_loop(a, _K)                       # (b, 1)
        pm = _topk_mean_loop(1.0 - na, _K)                # (b, 1)
        a_loss = jnp.sum(jnp.minimum(-jnp.log(am), _BCE_CLAMP),
                         axis=0, keepdims=True) * (1.0 / b)
        pano_loss = jnp.sum(jnp.minimum(-jnp.log(pm), _BCE_CLAMP),
                            axis=0, keepdims=True) * (1.0 / b)

    # ------------------------------------------------ masked per-sample BCE
    col = lax.broadcasted_iota(jnp.int32, (b, t), 1)
    valid = col < seq_ref[...]                            # (b, T), one vector compare
    denom = jnp.sum(valid.astype(f32), axis=-1, keepdims=True)   # (b, 1)

    p_n = jnp.where(valid, n, 1.0)            # target 1: -log(x)
    p_an = jnp.where(valid, 1.0 - an, 1.0)    # target 0: -log(1 - x)
    bce_n = jnp.minimum(-jnp.log(p_n), _BCE_CLAMP)
    bce_an = jnp.minimum(-jnp.log(p_an), _BCE_CLAMP)
    # NOTE: seq_len == 0 gives denom == 0 -> NaN, matching the reference.
    n_rows = jnp.sum(bce_n, axis=-1, keepdims=True) / denom       # (b, 1)
    an_rows = jnp.sum(bce_an, axis=-1, keepdims=True) / denom     # (b, 1)
    n_loss = jnp.sum(n_rows, axis=0, keepdims=True) * (1.0 / b)   # (1, 1)
    an_loss = jnp.sum(an_rows, axis=0, keepdims=True) * (1.0 / b)

    # ---------------------------------------------------- fused mean epilogue
    out_ref[0:1, 0:1] = pano_loss
    out_ref[0:1, 1:2] = a_loss
    out_ref[0:1, 2:3] = n_loss
    out_ref[0:1, 3:4] = an_loss


def _bce_terms_pallas(a_att, n_att, a_natt, n_aatt, seq_len):
    b, t = a_att.shape
    assert t >= _K, f"temporal length {t} must be >= k={_K}"
    seq = seq_len.astype(jnp.int32).reshape(b, 1)

    vmem = pltpu.MemorySpace.VMEM
    # Large-T safety: raise the scoped-VMEM default (16 MiB on v5e) before the
    # fallback path's live arrays get close to it.  Not triggered at small T.
    compiler_params = None
    if t > 2048:
        compiler_params = pltpu.CompilerParams(vmem_limit_bytes=64 * 1024 * 1024)

    out = pl.pallas_call(
        _ad_loss_kernel,
        out_shape=jax.ShapeDtypeStruct((1, 4), jnp.float32),
        in_specs=[pl.BlockSpec(memory_space=vmem) for _ in range(5)],
        out_specs=pl.BlockSpec(memory_space=vmem),
        compiler_params=compiler_params,
    )(a_att, n_att, a_natt, n_aatt, seq)

    # [panomaly_loss, A_loss, N_loss, A_Nloss]
    return out[0, 0], out[0, 1], out[0, 2], out[0, 3]


def ad_loss(result, label, seq_len):
    """JAX/Pallas equivalent of AD_Loss.forward."""
    label = label.astype(jnp.float32)
    _b = label.shape[0] // 2
    att = result['frame']
    _t = att.shape[1]   # kept for parity with the module

    triplet = result['triplet_margin']
    kl_loss = result['kl_loss']
    distance = result['distance']
    cos_loss = result['cos_loss']

    panomaly_loss, a_loss, n_loss, a_nloss = _bce_terms_pallas(
        result['A_att'], result['N_att'], result['A_Natt'], result['N_Aatt'],
        seq_len)

    cost = (0.1 * (a_loss + panomaly_loss + n_loss + a_nloss)
            + 0.1 * triplet + 0.001 * kl_loss + 0.0001 * distance
            + 0.5 * cos_loss)

    loss = {
        'total_loss': cost,
        'N_Aatt': panomaly_loss,
        'A_loss': a_loss,
        'N_loss': n_loss,
        'A_Nloss': a_nloss,
        'triplet': triplet,
        'kl_loss': kl_loss,
    }
    return cost, loss


def _reference(result, seq_len):
    # pure-JAX reference for sanity checking
    def bce_pos(p): return jnp.minimum(-jnp.log(p), _BCE_CLAMP)
    def bce_neg(p): return jnp.minimum(-jnp.log(1.0 - p), _BCE_CLAMP)
    pano = jnp.mean(lax.top_k(1.0 - result['N_Aatt'], _K)[0], axis=-1)
    pano_loss = jnp.mean(bce_pos(pano))
    a_top = jnp.mean(lax.top_k(result['A_att'], _K)[0], axis=-1)
    a_loss = jnp.mean(bce_pos(a_top))
    col = jnp.arange(result['N_att'].shape[1])[None, :]
    mask = (col < seq_len[:, None]).astype(jnp.float32)
    denom = jnp.sum(mask, axis=-1)
    n_loss = jnp.mean(jnp.sum(bce_pos(result['N_att']) * mask, axis=-1) / denom)
    an_loss = jnp.mean(jnp.sum(bce_neg(result['A_Natt']) * mask, axis=-1) / denom)
    return pano_loss, a_loss, n_loss, an_loss


if __name__ == "__main__":
    key = jax.random.PRNGKey(0)
    ks = jax.random.split(key, 10)

    b, t = 2, 32                      # T must be >= k (=20)
    B = 2 * b

    label = jnp.concatenate([jnp.ones((b,)), jnp.zeros((b,))]).astype(jnp.float32)
    result = {
        'frame': jax.random.uniform(ks[0], (B, t), minval=0.05, maxval=0.95),
        'A_att': jax.random.uniform(ks[1], (b, t), minval=0.05, maxval=0.95),
        'N_att': jax.random.uniform(ks[2], (b, t), minval=0.05, maxval=0.95),
        'A_Natt': jax.random.uniform(ks[3], (b, t), minval=0.05, maxval=0.95),
        'N_Aatt': jax.random.uniform(ks[4], (b, t), minval=0.05, maxval=0.95),
        'triplet_margin': jax.random.uniform(ks[5], ()),
        'kl_loss': jax.random.uniform(ks[6], ()),
        'distance': jax.random.uniform(ks[7], ()),
        'cos_loss': jax.random.uniform(ks[8], ()),
    }
    seq_len = jnp.array([28, 21], dtype=jnp.int32)

    cost, loss = ad_loss(result, label, seq_len)
    cost = jax.block_until_ready(cost)

    # sanity check against a pure-JAX reference
    ref = _reference(result, seq_len)
    got = (loss['N_Aatt'], loss['A_loss'], loss['N_loss'], loss['A_Nloss'])
    for r, g in zip(ref, got):
        assert jnp.allclose(r, g, rtol=1e-4, atol=1e-5), (r, g)

    print("KERNEL_OK")
</pallas_src>

<mosaic_0001>
module attributes {stable_mosaic.version = 11 : i64} {
  func.func @_ad_loss_kernel(%arg0: memref<2x32xf32, #tpu.memory_space<vmem>>, %arg1: memref<2x32xf32, #tpu.memory_space<vmem>>, %arg2: memref<2x32xf32, #tpu.memory_space<vmem>>, %arg3: memref<2x32xf32, #tpu.memory_space<vmem>>, %arg4: memref<2x1xi32, #tpu.memory_space<vmem>>, %arg5: memref<1x4xf32, #tpu.memory_space<vmem>>) attributes {dimension_semantics = [], scalar_prefetch = 0 : i64, scratch_operands = 0 : i64, tpu.core_type = #tpu.core_type<tc>} {
    %c0 = arith.constant 0 : index
    %c0_0 = arith.constant 0 : index
    %0 = vector.load %arg0[%c0, %c0_0] : memref<2x32xf32, #tpu.memory_space<vmem>>, vector<2x32xf32>
    %c0_1 = arith.constant 0 : index
    %c0_2 = arith.constant 0 : index
    %1 = vector.load %arg1[%c0_1, %c0_2] : memref<2x32xf32, #tpu.memory_space<vmem>>, vector<2x32xf32>
    %c0_3 = arith.constant 0 : index
    %c0_4 = arith.constant 0 : index
    %2 = vector.load %arg2[%c0_3, %c0_4] : memref<2x32xf32, #tpu.memory_space<vmem>>, vector<2x32xf32>
    %c0_5 = arith.constant 0 : index
    %c0_6 = arith.constant 0 : index
    %3 = vector.load %arg3[%c0_5, %c0_6] : memref<2x32xf32, #tpu.memory_space<vmem>>, vector<2x32xf32>
    %4 = tpu.iota {dimensions = array<i32: 0>} : vector<32x32xi32>
    %5 = tpu.iota {dimensions = array<i32: 1>} : vector<32x32xi32>
    %6 = arith.cmpi eq, %4, %5 : vector<32x32xi32>
    %7 = arith.extui %6 : vector<32x32xi1> to vector<32x32xi32>
    %8 = arith.sitofp %7 : vector<32x32xi32> to vector<32x32xf32>
    %9 = arith.cmpi slt, %5, %4 : vector<32x32xi32>
    %10 = vector.extract_strided_slice %0 {offsets = [0, 0], sizes = [1, 32], strides = [1, 1]} : vector<2x32xf32> to vector<1x32xf32>
    %cst = arith.constant dense<0.000000e+00> : vector<32x1xf32>
    %11 = tpu.matmul %8, %10, %cst {dimension_numbers = #tpu.dot_dimension_numbers<[1], [1], [0], [0], [0, 0, 1, 0], [], []>, precision = #tpu.contract_precision<fp32>} : vector<32x32xf32>, vector<1x32xf32>, vector<32x1xf32> -> vector<32x1xf32>
    %12 = vector.broadcast %10 : vector<1x32xf32> to vector<32x32xf32>
    %13 = vector.broadcast %11 : vector<32x1xf32> to vector<32x32xf32>
    %14 = arith.cmpf ogt, %12, %13 : vector<32x32xf32>
    %15 = vector.broadcast %10 : vector<1x32xf32> to vector<32x32xf32>
    %16 = vector.broadcast %11 : vector<32x1xf32> to vector<32x32xf32>
    %17 = arith.cmpf oeq, %15, %16 : vector<32x32xf32>
    %18 = arith.andi %17, %9 : vector<32x32xi1>
    %19 = arith.ori %14, %18 : vector<32x32xi1>
    %20 = arith.extui %19 : vector<32x32xi1> to vector<32x32xi32>
    %21 = arith.sitofp %20 : vector<32x32xi32> to vector<32x32xf32>
    %cst_7 = arith.constant dense<0.000000e+00> : vector<32xf32>
    %22 = vector.multi_reduction <add>, %21, %cst_7 [0] : vector<32x32xf32> to vector<32xf32>
    %23 = vector.shape_cast %22 : vector<32xf32> to vector<1x32xf32>
    %cst_8 = arith.constant 1.200000e+01 : f32
    %24 = vector.broadcast %cst_8 : f32 to vector<1x32xf32>
    %25 = arith.cmpf oge, %23, %24 : vector<1x32xf32>
    %26 = arith.extui %25 : vector<1x32xi1> to vector<1x32xi32>
    %27 = arith.sitofp %26 : vector<1x32xi32> to vector<1x32xf32>
    %28 = arith.mulf %10, %27 : vector<1x32xf32>
    %cst_9 = arith.constant dense<0.000000e+00> : vector<1xf32>
    %29 = vector.multi_reduction <add>, %28, %cst_9 [1] : vector<1x32xf32> to vector<1xf32>
    %30 = vector.shape_cast %29 : vector<1xf32> to vector<1x1xf32>
    %cst_10 = arith.constant 5.000000e-02 : f32
    %31 = vector.broadcast %cst_10 : f32 to vector<1x1xf32>
    %32 = arith.mulf %30, %31 : vector<1x1xf32>
    %33 = math.log %32 : vector<1x1xf32>
    %cst_11 = arith.constant 0.000000e+00 : f32
    %34 = vector.broadcast %cst_11 : f32 to vector<1x1xf32>
    %35 = arith.subf %34, %33 : vector<1x1xf32>
    %cst_12 = arith.constant 1.000000e+02 : f32
    %36 = vector.broadcast %cst_12 : f32 to vector<1x1xf32>
    %37 = arith.minimumf %35, %36 : vector<1x1xf32>
    %38 = vector.extract_strided_slice %0 {offsets = [1, 0], sizes = [1, 32], strides = [1, 1]} : vector<2x32xf32> to vector<1x32xf32>
    %cst_13 = arith.constant dense<0.000000e+00> : vector<32x1xf32>
    %39 = tpu.matmul %8, %38, %cst_13 {dimension_numbers = #tpu.dot_dimension_numbers<[1], [1], [0], [0], [0, 0, 1, 0], [], []>, precision = #tpu.contract_precision<fp32>} : vector<32x32xf32>, vector<1x32xf32>, vector<32x1xf32> -> vector<32x1xf32>
    %40 = vector.broadcast %38 : vector<1x32xf32> to vector<32x32xf32>
    %41 = vector.broadcast %39 : vector<32x1xf32> to vector<32x32xf32>
    %42 = arith.cmpf ogt, %40, %41 : vector<32x32xf32>
    %43 = vector.broadcast %38 : vector<1x32xf32> to vector<32x32xf32>
    %44 = vector.broadcast %39 : vector<32x1xf32> to vector<32x32xf32>
    %45 = arith.cmpf oeq, %43, %44 : vector<32x32xf32>
    %46 = arith.andi %45, %9 : vector<32x32xi1>
    %47 = arith.ori %42, %46 : vector<32x32xi1>
    %48 = arith.extui %47 : vector<32x32xi1> to vector<32x32xi32>
    %49 = arith.sitofp %48 : vector<32x32xi32> to vector<32x32xf32>
    %cst_14 = arith.constant dense<0.000000e+00> : vector<32xf32>
    %50 = vector.multi_reduction <add>, %49, %cst_14 [0] : vector<32x32xf32> to vector<32xf32>
    %51 = vector.shape_cast %50 : vector<32xf32> to vector<1x32xf32>
    %cst_15 = arith.constant 1.200000e+01 : f32
    %52 = vector.broadcast %cst_15 : f32 to vector<1x32xf32>
    %53 = arith.cmpf oge, %51, %52 : vector<1x32xf32>
    %54 = arith.extui %53 : vector<1x32xi1> to vector<1x32xi32>
    %55 = arith.sitofp %54 : vector<1x32xi32> to vector<1x32xf32>
    %56 = arith.mulf %38, %55 : vector<1x32xf32>
    %cst_16 = arith.constant dense<0.000000e+00> : vector<1xf32>
    %57 = vector.multi_reduction <add>, %56, %cst_16 [1] : vector<1x32xf32> to vector<1xf32>
    %58 = vector.shape_cast %57 : vector<1xf32> to vector<1x1xf32>
    %cst_17 = arith.constant 5.000000e-02 : f32
    %59 = vector.broadcast %cst_17 : f32 to vector<1x1xf32>
    %60 = arith.mulf %58, %59 : vector<1x1xf32>
    %61 = math.log %60 : vector<1x1xf32>
    %cst_18 = arith.constant 0.000000e+00 : f32
    %62 = vector.broadcast %cst_18 : f32 to vector<1x1xf32>
    %63 = arith.subf %62, %61 : vector<1x1xf32>
    %cst_19 = arith.constant 1.000000e+02 : f32
    %64 = vector.broadcast %cst_19 : f32 to vector<1x1xf32>
    %65 = arith.minimumf %63, %64 : vector<1x1xf32>
    %66 = arith.addf %37, %65 : vector<1x1xf32>
    %cst_20 = arith.constant 5.000000e-01 : f32
    %67 = vector.broadcast %cst_20 : f32 to vector<1x1xf32>
    %68 = arith.mulf %66, %67 : vector<1x1xf32>
    %cst_21 = arith.constant 1.000000e+00 : f32
    %69 = vector.broadcast %cst_21 : f32 to vector<2x32xf32>
    %70 = arith.subf %69, %3 : vector<2x32xf32>
    %71 = vector.extract_strided_slice %70 {offsets = [0, 0], sizes = [1, 32], strides = [1, 1]} : vector<2x32xf32> to vector<1x32xf32>
    %cst_22 = arith.constant dense<0.000000e+00> : vector<32x1xf32>
    %72 = tpu.matmul %8, %71, %cst_22 {dimension_numbers = #tpu.dot_dimension_numbers<[1], [1], [0], [0], [0, 0, 1, 0], [], []>, precision = #tpu.contract_precision<fp32>} : vector<32x32xf32>, vector<1x32xf32>, vector<32x1xf32> -> vector<32x1xf32>
    %73 = vector.broadcast %71 : vector<1x32xf32> to vector<32x32xf32>
    %74 = vector.broadcast %72 : vector<32x1xf32> to vector<32x32xf32>
    %75 = arith.cmpf ogt, %73, %74 : vector<32x32xf32>
    %76 = vector.broadcast %71 : vector<1x32xf32> to vector<32x32xf32>
    %77 = vector.broadcast %72 : vector<32x1xf32> to vector<32x32xf32>
    %78 = arith.cmpf oeq, %76, %77 : vector<32x32xf32>
    %79 = arith.andi %78, %9 : vector<32x32xi1>
    %80 = arith.ori %75, %79 : vector<32x32xi1>
    %81 = arith.extui %80 : vector<32x32xi1> to vector<32x32xi32>
    %82 = arith.sitofp %81 : vector<32x32xi32> to vector<32x32xf32>
    %cst_23 = arith.constant dense<0.000000e+00> : vector<32xf32>
    %83 = vector.multi_reduction <add>, %82, %cst_23 [0] : vector<32x32xf32> to vector<32xf32>
    %84 = vector.shape_cast %83 : vector<32xf32> to vector<1x32xf32>
    %cst_24 = arith.constant 1.200000e+01 : f32
    %85 = vector.broadcast %cst_24 : f32 to vector<1x32xf32>
    %86 = arith.cmpf oge, %84, %85 : vector<1x32xf32>
    %87 = arith.extui %86 : vector<1x32xi1> to vector<1x32xi32>
    %88 = arith.sitofp %87 : vector<1x32xi32> to vector<1x32xf32>
    %89 = arith.mulf %71, %88 : vector<1x32xf32>
    %cst_25 = arith.constant dense<0.000000e+00> : vector<1xf32>
    %90 = vector.multi_reduction <add>, %89, %cst_25 [1] : vector<1x32xf32> to vector<1xf32>
    %91 = vector.shape_cast %90 : vector<1xf32> to vector<1x1xf32>
    %cst_26 = arith.constant 5.000000e-02 : f32
    %92 = vector.broadcast %cst_26 : f32 to vector<1x1xf32>
    %93 = arith.mulf %91, %92 : vector<1x1xf32>
    %94 = math.log %93 : vector<1x1xf32>
    %cst_27 = arith.constant 0.000000e+00 : f32
    %95 = vector.broadcast %cst_27 : f32 to vector<1x1xf32>
    %96 = arith.subf %95, %94 : vector<1x1xf32>
    %cst_28 = arith.constant 1.000000e+02 : f32
    %97 = vector.broadcast %cst_28 : f32 to vector<1x1xf32>
    %98 = arith.minimumf %96, %97 : vector<1x1xf32>
    %99 = vector.extract_strided_slice %70 {offsets = [1, 0], sizes = [1, 32], strides = [1, 1]} : vector<2x32xf32> to vector<1x32xf32>
    %cst_29 = arith.constant dense<0.000000e+00> : vector<32x1xf32>
    %100 = tpu.matmul %8, %99, %cst_29 {dimension_numbers = #tpu.dot_dimension_numbers<[1], [1], [0], [0], [0, 0, 1, 0], [], []>, precision = #tpu.contract_precision<fp32>} : vector<32x32xf32>, vector<1x32xf32>, vector<32x1xf32> -> vector<32x1xf32>
    %101 = vector.broadcast %99 : vector<1x32xf32> to vector<32x32xf32>
    %102 = vector.broadcast %100 : vector<32x1xf32> to vector<32x32xf32>
    %103 = arith.cmpf ogt, %101, %102 : vector<32x32xf32>
    %104 = vector.broadcast %99 : vector<1x32xf32> to vector<32x32xf32>
    %105 = vector.broadcast %100 : vector<32x1xf32> to vector<32x32xf32>
    %106 = arith.cmpf oeq, %104, %105 : vector<32x32xf32>
    %107 = arith.andi %106, %9 : vector<32x32xi1>
    %108 = arith.ori %103, %107 : vector<32x32xi1>
    %109 = arith.extui %108 : vector<32x32xi1> to vector<32x32xi32>
    %110 = arith.sitofp %109 : vector<32x32xi32> to vector<32x32xf32>
    %cst_30 = arith.constant dense<0.000000e+00> : vector<32xf32>
    %111 = vector.multi_reduction <add>, %110, %cst_30 [0] : vector<32x32xf32> to vector<32xf32>
    %112 = vector.shape_cast %111 : vector<32xf32> to vector<1x32xf32>
    %cst_31 = arith.constant 1.200000e+01 : f32
    %113 = vector.broadcast %cst_31 : f32 to vector<1x32xf32>
    %114 = arith.cmpf oge, %112, %113 : vector<1x32xf32>
    %115 = arith.extui %114 : vector<1x32xi1> to vector<1x32xi32>
    %116 = arith.sitofp %115 : vector<1x32xi32> to vector<1x32xf32>
    %117 = arith.mulf %99, %116 : vector<1x32xf32>
    %cst_32 = arith.constant dense<0.000000e+00> : vector<1xf32>
    %118 = vector.multi_reduction <add>, %117, %cst_32 [1] : vector<1x32xf32> to vector<1xf32>
    %119 = vector.shape_cast %118 : vector<1xf32> to vector<1x1xf32>
    %cst_33 = arith.constant 5.000000e-02 : f32
    %120 = vector.broadcast %cst_33 : f32 to vector<1x1xf32>
    %121 = arith.mulf %119, %120 : vector<1x1xf32>
    %122 = math.log %121 : vector<1x1xf32>
    %cst_34 = arith.constant 0.000000e+00 : f32
    %123 = vector.broadcast %cst_34 : f32 to vector<1x1xf32>
    %124 = arith.subf %123, %122 : vector<1x1xf32>
    %cst_35 = arith.constant 1.000000e+02 : f32
    %125 = vector.broadcast %cst_35 : f32 to vector<1x1xf32>
    %126 = arith.minimumf %124, %125 : vector<1x1xf32>
    %127 = arith.addf %98, %126 : vector<1x1xf32>
    %cst_36 = arith.constant 5.000000e-01 : f32
    %128 = vector.broadcast %cst_36 : f32 to vector<1x1xf32>
    %129 = arith.mulf %127, %128 : vector<1x1xf32>
    %130 = tpu.iota {dimensions = array<i32: 1>} : vector<2x32xi32>
    %c0_37 = arith.constant 0 : index
    %c0_38 = arith.constant 0 : index
    %131 = vector.load %arg4[%c0_37, %c0_38] : memref<2x1xi32, #tpu.memory_space<vmem>>, vector<2x1xi32>
    %132 = vector.broadcast %131 : vector<2x1xi32> to vector<2x32xi32>
    %133 = arith.cmpi slt, %130, %132 : vector<2x32xi32>
    %134 = arith.extui %133 : vector<2x32xi1> to vector<2x32xi32>
    %135 = arith.sitofp %134 : vector<2x32xi32> to vector<2x32xf32>
    %cst_39 = arith.constant dense<0.000000e+00> : vector<2xf32>
    %136 = vector.multi_reduction <add>, %135, %cst_39 [1] : vector<2x32xf32> to vector<2xf32>
    %137 = vector.shape_cast %136 : vector<2xf32> to vector<2x1xf32>
    %cst_40 = arith.constant 1.000000e+00 : f32
    %138 = vector.broadcast %cst_40 : f32 to vector<2x32xf32>
    %139 = arith.select %133, %1, %138 : vector<2x32xi1>, vector<2x32xf32>
    %cst_41 = arith.constant 1.000000e+00 : f32
    %140 = vector.broadcast %cst_41 : f32 to vector<2x32xf32>
    %141 = arith.subf %140, %2 : vector<2x32xf32>
    %cst_42 = arith.constant 1.000000e+00 : f32
    %142 = vector.broadcast %cst_42 : f32 to vector<2x32xf32>
    %143 = arith.select %133, %141, %142 : vector<2x32xi1>, vector<2x32xf32>
    %144 = math.log %139 : vector<2x32xf32>
    %cst_43 = arith.constant 0.000000e+00 : f32
    %145 = vector.broadcast %cst_43 : f32 to vector<2x32xf32>
    %146 = arith.subf %145, %144 : vector<2x32xf32>
    %cst_44 = arith.constant 1.000000e+02 : f32
    %147 = vector.broadcast %cst_44 : f32 to vector<2x32xf32>
    %148 = arith.minimumf %146, %147 : vector<2x32xf32>
    %149 = math.log %143 : vector<2x32xf32>
    %cst_45 = arith.constant 0.000000e+00 : f32
    %150 = vector.broadcast %cst_45 : f32 to vector<2x32xf32>
    %151 = arith.subf %150, %149 : vector<2x32xf32>
    %cst_46 = arith.constant 1.000000e+02 : f32
    %152 = vector.broadcast %cst_46 : f32 to vector<2x32xf32>
    %153 = arith.minimumf %151, %152 : vector<2x32xf32>
    %cst_47 = arith.constant dense<0.000000e+00> : vector<2xf32>
    %154 = vector.multi_reduction <add>, %148, %cst_47 [1] : vector<2x32xf32> to vector<2xf32>
    %155 = vector.shape_cast %154 : vector<2xf32> to vector<2x1xf32>
    %156 = arith.divf %155, %137 : vector<2x1xf32>
    %cst_48 = arith.constant dense<0.000000e+00> : vector<2xf32>
    %157 = vector.multi_reduction <add>, %153, %cst_48 [1] : vector<2x32xf32> to vector<2xf32>
    %158 = vector.shape_cast %157 : vector<2xf32> to vector<2x1xf32>
    %159 = arith.divf %158, %137 : vector<2x1xf32>
    %cst_49 = arith.constant dense<0.000000e+00> : vector<1xf32>
    %160 = vector.multi_reduction <add>, %156, %cst_49 [0] : vector<2x1xf32> to vector<1xf32>
    %161 = vector.shape_cast %160 : vector<1xf32> to vector<1x1xf32>
    %cst_50 = arith.constant 5.000000e-01 : f32
    %162 = vector.broadcast %cst_50 : f32 to vector<1x1xf32>
    %163 = arith.mulf %161, %162 : vector<1x1xf32>
    %cst_51 = arith.constant dense<0.000000e+00> : vector<1xf32>
    %164 = vector.multi_reduction <add>, %159, %cst_51 [0] : vector<2x1xf32> to vector<1xf32>
    %165 = vector.shape_cast %164 : vector<1xf32> to vector<1x1xf32>
    %cst_52 = arith.constant 5.000000e-01 : f32
    %166 = vector.broadcast %cst_52 : f32 to vector<1x1xf32>
    %167 = arith.mulf %165, %166 : vector<1x1xf32>
    %c0_53 = arith.constant 0 : index
    %c0_54 = arith.constant 0 : index
    %168 = vector.load %arg5[%c0_53, %c0_54] : memref<1x4xf32, #tpu.memory_space<vmem>>, vector<1x1xf32>
    tpu.vector_store %arg5[%c0_53, %c0_54], %129 {strides = array<i32>} : memref<1x4xf32, #tpu.memory_space<vmem>>, vector<1x1xf32>,
    %c0_55 = arith.constant 0 : index
    %c1 = arith.constant 1 : index
    %169 = vector.load %arg5[%c0_55, %c1] : memref<1x4xf32, #tpu.memory_space<vmem>>, vector<1x1xf32>
    tpu.vector_store %arg5[%c0_55, %c1], %68 {strides = array<i32>} : memref<1x4xf32, #tpu.memory_space<vmem>>, vector<1x1xf32>,
    %c0_56 = arith.constant 0 : index
    %c2 = arith.constant 2 : index
    %170 = vector.load %arg5[%c0_56, %c2] : memref<1x4xf32, #tpu.memory_space<vmem>>, vector<1x1xf32>
    tpu.vector_store %arg5[%c0_56, %c2], %163 {strides = array<i32>} : memref<1x4xf32, #tpu.memory_space<vmem>>, vector<1x1xf32>,
    %c0_57 = arith.constant 0 : index
    %c3 = arith.constant 3 : index
    %171 = vector.load %arg5[%c0_57, %c3] : memref<1x4xf32, #tpu.memory_space<vmem>>, vector<1x1xf32>
    tpu.vector_store %arg5[%c0_57, %c3], %167 {strides = array<i32>} : memref<1x4xf32, #tpu.memory_space<vmem>>, vector<1x1xf32>,
    return
  }
}

</mosaic_0001>

<llo_original>
// kernel: tpu_custom_call.1
$region0: #{tpu_custom_call.1}
  #allocation0 [shape = 'u32[]', space=smem, size = 0x4, offset = 0x4, fixed_abs, tag = 'smem constant byte address 0x4 - core index']
  #allocation1 [shape = 'u32[144,128]{1,0:T(1,128)}', space=vmem, size = 0x12000, scoped, tag = 'internal scratch']
  %s0 = inlined_call_operand.vmem [shape: f32[2,32], index: 0, kind: input, shape index: {}]
  %s1 = inlined_call_operand.vmem [shape: f32[2,32], index: 1, kind: input, shape index: {}]
  %s2 = inlined_call_operand.vmem [shape: f32[2,32], index: 2, kind: input, shape index: {}]
  %s3 = inlined_call_operand.vmem [shape: f32[2,32], index: 3, kind: input, shape index: {}]
  %s4 = inlined_call_operand.vmem [shape: s32[2,1], index: 4, kind: input, shape index: {}]
  %s5 = inlined_call_operand.hbm [shape: f32[1,4], index: 5, kind: output, shape index: {}]
  %s6 = sld [smem:[#allocation0]]
  $region30: #{tpu_custom_call.1} parent=0
    _
  %s8 = ssub.s32 1, %s6
  %s9 = scalar_select 0, %s8, %s6
  $region1: #{tpu_custom_call.1} parent=0
    #allocation2 [shape = 'u8[512]{0}', space=vmem, size = 0x400, scoped, tag = 'output window, operand 0, single buffered']
    #allocation3 [shape = 's32[1]{0}', space=sflag, size = 0x4, scoped, tag = 'scoped memory for tpu_custom_call.1']
    %10 = vsyncpa [#allocation3], 0
    // Predicated region
    $region2: #{tpu_custom_call.1} parent=1 // pred_check
      _
    $region3: #{tpu_custom_call.1} parent=1 // pred_check_branch
      %12 = sbr.rel (0) target = $region5
    $region4: #{tpu_custom_call.1} parent=1 // pred_region
      _
    $region5: #{tpu_custom_call.1} parent=1 // pred_fallthru
      _
    // Predicated region
    $region6: #{tpu_custom_call.1} parent=1 // pred_check
      _
    $region7: #{tpu_custom_call.1} parent=1 // pred_check_branch
      %14 = sbr.rel (0) target = $region9
    $region8: #{tpu_custom_call.1} parent=1 // pred_region
      _
    $region9: #{tpu_custom_call.1} parent=1 // pred_fallthru
      _
    // Predicated region
    $region10: #{tpu_custom_call.1} parent=1 // pred_check
      _
    $region11: #{tpu_custom_call.1} parent=1 // pred_check_branch
      %16 = sbr.rel (0) target = $region13
    $region12: #{tpu_custom_call.1} parent=1 // pred_region
      _
    $region13: #{tpu_custom_call.1} parent=1 // pred_fallthru
      _
    // Predicated region
    $region14: #{tpu_custom_call.1} parent=1 // pred_check
      _
    $region15: #{tpu_custom_call.1} parent=1 // pred_check_branch
      %18 = sbr.rel (0) target = $region17
    $region16: #{tpu_custom_call.1} parent=1 // pred_region
      _
    $region17: #{tpu_custom_call.1} parent=1 // pred_fallthru
      _
    // Predicated region
    $region18: #{tpu_custom_call.1} parent=1 // pred_check
      _
    $region19: #{tpu_custom_call.1} parent=1 // pred_check_branch
      %20 = sbr.rel (0) target = $region21
    $region20: #{tpu_custom_call.1} parent=1 // pred_region
      _
    $region21: #{tpu_custom_call.1} parent=1 // pred_fallthru
      _
    %v21 = vld [vmem:[%s0] sm:$0x3]
    %v22 = vld [vmem:[%s1] sm:$0x3]
    %v23 = vld [vmem:[%s2] sm:$0x3]
    %v24 = vld [vmem:[%s3] sm:$0x3]
    %v25 = vlaneseq
    %v26 = vshrl.u32 %v25, 7
    %v27 = vadd.s32 %v26, 8
    %v28 = vadd.s32 %v26, 16
    %v29 = vadd.s32 %v26, 24
    %v30 = vlaneseq
    %v31 = vand.u32 %v30, 127
    %vm32 = vcmp.eq.s32.totalorder %v26, %v31
    %vm33 = vcmp.eq.s32.totalorder %v27, %v31
    %vm34 = vcmp.eq.s32.totalorder %v28, %v31
    %vm35 = vcmp.eq.s32.totalorder %v29, %v31
    %v36 = vsel %vm32, 1, 0
    %v37 = vsel %vm33, 1, 0
    %v38 = vsel %vm34, 1, 0
    %v39 = vsel %vm35, 1, 0
    %v40 = vcvt.s32.f32 %v36
    %v41 = vcvt.s32.f32 %v37
    %v42 = vcvt.s32.f32 %v38
    %v43 = vcvt.s32.f32 %v39
    %vm44 = vcmp.lt.s32.totalorder %v31, %v26
    %vm45 = vcmp.lt.s32.totalorder %v31, %v27
    %vm46 = vcmp.lt.s32.totalorder %v31, %v28
    %vm47 = vcmp.lt.s32.totalorder %v31, %v29
    %v48 = vlaneseq
    %v49 = vshrl.u32 %v48, 7
    %v50 = vsub.s32 0, %v49
    %v51 = vrot.slane %v21, %v50
    %v52 = vmul.f32 %v40, %v51
    %v53 = vmul.f32 %v41, %v51
    %v54 = vmul.f32 %v42, %v51
    %v55 = vmul.f32 %v43, %v51
    %vm56 = vcmask 261120
    %v57 = vsel %vm56, %v52, 0.0
    %58 = vadd.xlane.f32.xlu0 %v57
    %v59 = vpop.xlane.xlu0 %58
    %v60 = vsel %vm56, %v53, 0.0
    %61 = vadd.xlane.f32.xlu0 %v60
    %v62 = vpop.xlane.xlu0 %61
    %v63 = vsel %vm56, %v54, 0.0
    %64 = vadd.xlane.f32.xlu0 %v63
    %v65 = vpop.xlane.xlu0 %64
    %v66 = vsel %vm56, %v55, 0.0
    %67 = vadd.xlane.f32.xlu0 %v66
    %v68 = vpop.xlane.xlu0 %67
    %vm69 = vcmp.gt.f32.partialorder %v51, %v59
    %vm70 = vcmp.gt.f32.partialorder %v51, %v62
    %vm71 = vcmp.gt.f32.partialorder %v51, %v65
    %vm72 = vcmp.gt.f32.partialorder %v51, %v68
    %vm73 = vcmp.eq.f32.partialorder %v51, %v59
    %vm74 = vcmp.eq.f32.partialorder %v51, %v62
    %vm75 = vcmp.eq.f32.partialorder %v51, %v65
    %vm76 = vcmp.eq.f32.partialorder %v51, %v68
    %vm77 = vmand %vm73, %vm44
    %vm78 = vmand %vm74, %vm45
    %vm79 = vmand %vm75, %vm46
    %vm80 = vmand %vm76, %vm47
    %vm81 = vmor %vm69, %vm77
    %vm82 = vmor %vm70, %vm78
    %vm83 = vmor %vm71, %vm79
    %vm84 = vmor %vm72, %vm80
    %v85 = vsel %vm81, 1, 0
    %v86 = vsel %vm82, 1, 0
    %v87 = vsel %vm83, 1, 0
    %v88 = vsel %vm84, 1, 0
    %v89 = vcvt.s32.f32 %v85
    %v90 = vcvt.s32.f32 %v86
    %v91 = vcvt.s32.f32 %v87
    %v92 = vcvt.s32.f32 %v88
    %v93 = vsel %vm56, %v89, 0.0
    %v94 = vsel %vm56, %v90, 0.0
    %v95 = vadd.f32 %v93, %v94
    %v96 = vsel %vm56, %v91, 0.0
    %v97 = vadd.f32 %v95, %v96
    %v98 = vsel %vm56, %v92, 0.0
    %v99 = vadd.f32 %v97, %v98
    %v100 = vrot.slane %v99, 4
    %v101 = vadd.f32 %v99, %v100
    %v102 = vrot.slane %v101, 2
    %v103 = vadd.f32 %v101, %v102
    %v104 = vrot.slane %v103, 1
    %v105 = vadd.f32 %v103, %v104
    %vm106 = vcmp.ge.f32.partialorder %v105, 12.0
    %v107 = vsel %vm106, 1, 0
    %v108 = vcvt.s32.f32 %v107
    %v109 = vmul.f32 %v21, %v108
    %vm110 = vcmask 253952
    %v111 = vsel %vm110, %v109, 0.0
    %112 = vadd.xlane.f32.xlu0 %v111
    %v113 = vpop.xlane.xlu0 %112
    %v114 = vmul.f32 %v113, 0.05
    %v115 = vlog2.pop %v114
    %v116 = vmul.f32 %v115, 0.6931472
    %v117 = vsub.f32 0.0, %v116
    %v118 = vmin.f32 %v117, 100.0
    %v119 = vlaneseq
    %v120 = vshrl.u32 %v119, 7
    %v121 = vsub.s32 1, %v120
    %v122 = vrot.slane %v21, %v121
    %v123 = vmul.f32 %v40, %v122
    %v124 = vmul.f32 %v41, %v122
    %v125 = vmul.f32 %v42, %v122
    %v126 = vmul.f32 %v43, %v122
    %v127 = vsel %vm56, %v123, 0.0
    %128 = vadd.xlane.f32.xlu0 %v127
    %v129 = vpop.xlane.xlu0 %128
    %v130 = vsel %vm56, %v124, 0.0
    %131 = vadd.xlane.f32.xlu0 %v130
    %v132 = vpop.xlane.xlu0 %131
    %v133 = vsel %vm56, %v125, 0.0
    %134 = vadd.xlane.f32.xlu0 %v133
    %v135 = vpop.xlane.xlu0 %134
    %v136 = vsel %vm56, %v126, 0.0
    %137 = vadd.xlane.f32.xlu0 %v136
    %v138 = vpop.xlane.xlu0 %137
    %vm139 = vcmp.gt.f32.partialorder %v122, %v129
    %vm140 = vcmp.gt.f32.partialorder %v122, %v132
    %vm141 = vcmp.gt.f32.partialorder %v122, %v135
    %vm142 = vcmp.gt.f32.partialorder %v122, %v138
    %vm143 = vcmp.eq.f32.partialorder %v122, %v129
    %vm144 = vcmp.eq.f32.partialorder %v122, %v132
    %vm145 = vcmp.eq.f32.partialorder %v122, %v135
    %vm146 = vcmp.eq.f32.partialorder %v122, %v138
    %vm147 = vmand %vm143, %vm44
    %vm148 = vmand %vm144, %vm45
    %vm149 = vmand %vm145, %vm46
    %vm150 = vmand %vm146, %vm47
    %vm151 = vmor %vm139, %vm147
    %vm152 = vmor %vm140, %vm148
    %vm153 = vmor %vm141, %vm149
    %vm154 = vmor %vm142, %vm150
    %v155 = vsel %vm151, 1, 0
    %v156 = vsel %vm152, 1, 0
    %v157 = vsel %vm153, 1, 0
    %v158 = vsel %vm154, 1, 0
    %v159 = vcvt.s32.f32 %v155
    %v160 = vcvt.s32.f32 %v156
    %v161 = vcvt.s32.f32 %v157
    %v162 = vcvt.s32.f32 %v158
    %v163 = vsel %vm56, %v159, 0.0
    %v164 = vsel %vm56, %v160, 0.0
    %v165 = vadd.f32 %v163, %v164
    %v166 = vsel %vm56, %v161, 0.0
    %v167 = vadd.f32 %v165, %v166
    %v168 = vsel %vm56, %v162, 0.0
    %v169 = vadd.f32 %v167, %v168
    %v170 = vrot.slane %v169, 4
    %v171 = vadd.f32 %v169, %v170
    %v172 = vrot.slane %v171, 2
    %v173 = vadd.f32 %v171, %v172
    %v174 = vrot.slane %v173, 1
    %v175 = vadd.f32 %v173, %v174
    %vm176 = vcmp.ge.f32.partialorder %v175, 12.0
    %v177 = vsel %vm176, 1, 0
    %v178 = vcvt.s32.f32 %v177
    %v179 = vmul.f32 %v21, %v178
    %vm180 = vcmask 254977
    %v181 = vsel %vm180, %v179, 0.0
    %182 = vadd.xlane.f32.xlu0 %v181
    %v183 = vpop.xlane.xlu0 %182
    %v184 = vmul.f32 %v183, 0.05
    %v185 = vlog2.pop %v184
    %v186 = vmul.f32 %v185, 0.6931472
    %v187 = vsub.f32 0.0, %v186
    %v188 = vmin.f32 %v187, 100.0
    %v190 = vrot.slane %v188, 1
    %v192 = vadd.f32 %v118, %v190
    %v193 = vmul.f32 %v192, 0.5
    %v194 = vsub.f32 1.0, %v24
    %v195 = vlaneseq
    %v196 = vshrl.u32 %v195, 7
    %v197 = vsub.s32 0, %v196
    %v198 = vrot.slane %v194, %v197
    %v199 = vmul.f32 %v40, %v198
    %v200 = vmul.f32 %v41, %v198
    %v201 = vmul.f32 %v42, %v198
    %v202 = vmul.f32 %v43, %v198
    %v203 = vsel %vm56, %v199, 0.0
    %204 = vadd.xlane.f32.xlu0 %v203
    %v205 = vpop.xlane.xlu0 %204
    %v206 = vsel %vm56, %v200, 0.0
    %207 = vadd.xlane.f32.xlu0 %v206
    %v208 = vpop.xlane.xlu0 %207
    %v209 = vsel %vm56, %v201, 0.0
    %210 = vadd.xlane.f32.xlu0 %v209
    %v211 = vpop.xlane.xlu0 %210
    %v212 = vsel %vm56, %v202, 0.0
    %213 = vadd.xlane.f32.xlu0 %v212
    %v214 = vpop.xlane.xlu0 %213
    %vm215 = vcmp.gt.f32.partialorder %v198, %v205
    %vm216 = vcmp.gt.f32.partialorder %v198, %v208
    %vm217 = vcmp.gt.f32.partialorder %v198, %v211
    %vm218 = vcmp.gt.f32.partialorder %v198, %v214
    %vm219 = vcmp.eq.f32.partialorder %v198, %v205
    %vm220 = vcmp.eq.f32.partialorder %v198, %v208
    %vm221 = vcmp.eq.f32.partialorder %v198, %v211
    %vm222 = vcmp.eq.f32.partialorder %v198, %v214
    %vm223 = vmand %vm219, %vm44
    %vm224 = vmand %vm220, %vm45
    %vm225 = vmand %vm221, %vm46
    %vm226 = vmand %vm222, %vm47
    %vm227 = vmor %vm215, %vm223
    %vm228 = vmor %vm216, %vm224
    %vm229 = vmor %vm217, %vm225
    %vm230 = vmor %vm218, %vm226
    %v231 = vsel %vm227, 1, 0
    %v232 = vsel %vm228, 1, 0
    %v233 = vsel %vm229, 1, 0
    %v234 = vsel %vm230, 1, 0
    %v235 = vcvt.s32.f32 %v231
    %v236 = vcvt.s32.f32 %v232
    %v237 = vcvt.s32.f32 %v233
    %v238 = vcvt.s32.f32 %v234
    %v239 = vsel %vm56, %v235, 0.0
    %v240 = vsel %vm56, %v236, 0.0
    %v241 = vadd.f32 %v239, %v240
    %v242 = vsel %vm56, %v237, 0.0
    %v243 = vadd.f32 %v241, %v242
    %v244 = vsel %vm56, %v238, 0.0
    %v245 = vadd.f32 %v243, %v244
    %v246 = vrot.slane %v245, 4
    %v247 = vadd.f32 %v245, %v246
    %v248 = vrot.slane %v247, 2
    %v249 = vadd.f32 %v247, %v248
    %v250 = vrot.slane %v249, 1
    %v251 = vadd.f32 %v249, %v250
    %vm252 = vcmp.ge.f32.partialorder %v251, 12.0
    %v253 = vsel %vm252, 1, 0
    %v254 = vcvt.s32.f32 %v253
    %v255 = vmul.f32 %v194, %v254
    %v256 = vsel %vm110, %v255, 0.0
    %257 = vadd.xlane.f32.xlu0 %v256
    %v258 = vpop.xlane.xlu0 %257
    %v259 = vmul.f32 %v258, 0.05
    %v260 = vlog2.pop %v259
    %v261 = vmul.f32 %v260, 0.6931472
    %v262 = vsub.f32 0.0, %v261
    %v263 = vmin.f32 %v262, 100.0
    %v264 = vlaneseq
    %v265 = vshrl.u32 %v264, 7
    %v266 = vsub.s32 1, %v265
    %v267 = vrot.slane %v194, %v266
    %v268 = vmul.f32 %v40, %v267
    %v269 = vmul.f32 %v41, %v267
    %v270 = vmul.f32 %v42, %v267
    %v271 = vmul.f32 %v43, %v267
    %v272 = vsel %vm56, %v268, 0.0
    %273 = vadd.xlane.f32.xlu0 %v272
    %v274 = vpop.xlane.xlu0 %273
    %v275 = vsel %vm56, %v269, 0.0
    %276 = vadd.xlane.f32.xlu0 %v275
    %v277 = vpop.xlane.xlu0 %276
    %v278 = vsel %vm56, %v270, 0.0
    %279 = vadd.xlane.f32.xlu0 %v278
    %v280 = vpop.xlane.xlu0 %279
    %v281 = vsel %vm56, %v271, 0.0
    %282 = vadd.xlane.f32.xlu0 %v281
    %v283 = vpop.xlane.xlu0 %282
    %vm284 = vcmp.gt.f32.partialorder %v267, %v274
    %vm285 = vcmp.gt.f32.partialorder %v267, %v277
    %vm286 = vcmp.gt.f32.partialorder %v267, %v280
    %vm287 = vcmp.gt.f32.partialorder %v267, %v283
    %vm288 = vcmp.eq.f32.partialorder %v267, %v274
    %vm289 = vcmp.eq.f32.partialorder %v267, %v277
    %vm290 = vcmp.eq.f32.partialorder %v267, %v280
    %vm291 = vcmp.eq.f32.partialorder %v267, %v283
    %vm292 = vmand %vm288, %vm44
    %vm293 = vmand %vm289, %vm45
    %vm294 = vmand %vm290, %vm46
    %vm295 = vmand %vm291, %vm47
    %vm296 = vmor %vm284, %vm292
    %vm297 = vmor %vm285, %vm293
    %vm298 = vmor %vm286, %vm294
    %vm299 = vmor %vm287, %vm295
    %v300 = vsel %vm296, 1, 0
    %v301 = vsel %vm297, 1, 0
    %v302 = vsel %vm298, 1, 0
    %v303 = vsel %vm299, 1, 0
    %v304 = vcvt.s32.f32 %v300
    %v305 = vcvt.s32.f32 %v301
    %v306 = vcvt.s32.f32 %v302
    %v307 = vcvt.s32.f32 %v303
    %v308 = vsel %vm56, %v304, 0.0
    %v309 = vsel %vm56, %v305, 0.0
    %v310 = vadd.f32 %v308, %v309
    %v311 = vsel %vm56, %v306, 0.0
    %v312 = vadd.f32 %v310, %v311
    %v313 = vsel %vm56, %v307, 0.0
    %v314 = vadd.f32 %v312, %v313
    %v315 = vrot.slane %v314, 4
    %v316 = vadd.f32 %v314, %v315
    %v317 = vrot.slane %v316, 2
    %v318 = vadd.f32 %v316, %v317
    %v319 = vrot.slane %v318, 1
    %v320 = vadd.f32 %v318, %v319
    %vm321 = vcmp.ge.f32.partialorder %v320, 12.0
    %v322 = vsel %vm321, 1, 0
    %v323 = vcvt.s32.f32 %v322
    %v324 = vmul.f32 %v194, %v323
    %v325 = vsel %vm180, %v324, 0.0
    %326 = vadd.xlane.f32.xlu0 %v325
    %v327 = vpop.xlane.xlu0 %326
    %v328 = vmul.f32 %v327, 0.05
    %v329 = vlog2.pop %v328
    %v330 = vmul.f32 %v329, 0.6931472
    %v331 = vsub.f32 0.0, %v330
    %v332 = vmin.f32 %v331, 100.0
    %v334 = vrot.slane %v332, 1
    %v336 = vadd.f32 %v263, %v334
    %v337 = vmul.f32 %v336, 0.5
    %v338 = vld [vmem:[%s4] sm:$0x3]
    %339 = vset.pattern.permute.xlu0 0
    %340 = vperm.xlu0 %339, %v338
    %v341 = vpop.permute.xlu0 %340
    %vm342 = vcmp.lt.s32.totalorder %v31, %v341
    %v343 = vsel %vm342, 1, 0
    %v344 = vcvt.s32.f32 %v343
    %vm345 = vcmask 254976
    %v346 = vsel %vm345, %v344, 0.0
    %347 = vadd.xlane.f32.xlu0 %v346
    %v348 = vpop.xlane.xlu0 %347
    %v349 = vsel %vm342, %v22, 1.0
    %v350 = vsub.f32 1.0, %v23
    %v351 = vsel %vm342, %v350, 1.0
    %v352 = vlog2.pop %v349
    %v353 = vmul.f32 %v352, 0.6931472
    %v354 = vsub.f32 0.0, %v353
    %v355 = vmin.f32 %v354, 100.0
    %v356 = vlog2.pop %v351
    %v357 = vmul.f32 %v356, 0.6931472
    %v358 = vsub.f32 0.0, %v357
    %v359 = vmin.f32 %v358, 100.0
    %v360 = vsel %vm345, %v355, 0.0
    %361 = vadd.xlane.f32.xlu0 %v360
    %v362 = vpop.xlane.xlu0 %361
    %v363 = vrcp.pop %v348
    %v364 = vmul.f32 %v362, %v363
    %v365 = vsel %vm345, %v359, 0.0
    %366 = vadd.xlane.f32.xlu0 %v365
    %v367 = vpop.xlane.xlu0 %366
    %v368 = vmul.f32 %v367, %v363
    %vm369 = vcmask 1041408
    %v370 = vsel %vm369, %v364, 0.0
    %v371 = vrot.slane %v370, 4
    %v372 = vadd.f32 %v370, %v371
    %v373 = vrot.slane %v372, 2
    %v374 = vadd.f32 %v372, %v373
    %v375 = vrot.slane %v374, 1
    %v376 = vadd.f32 %v374, %v375
    %v377 = vmul.f32 %v376, 0.5
    %v378 = vsel %vm369, %v368, 0.0
    %v379 = vrot.slane %v378, 4
    %v380 = vadd.f32 %v378, %v379
    %v381 = vrot.slane %v380, 2
    %v382 = vadd.f32 %v380, %v381
    %v383 = vrot.slane %v382, 1
    %v384 = vadd.f32 %v382, %v383
    %v385 = vmul.f32 %v384, 0.5
    %vm386 = vcmask 0
    %387 = vst.msk [vmem:[#allocation2] sm:$0x1] %vm386, %v337
    %389 = vrot.lane.b32.xlu0 %v193, 1
    %v390 = vpop.permute.xlu0 %389
    %vm392 = vcmask 8200
    %393 = vst.msk [vmem:[#allocation2] sm:$0x1] %vm392, %v390
    %vm394 = vcmask 16400
    %395 = vst.msk [vmem:[#allocation2] sm:$0x1] %vm394, %v377
    %vm396 = vcmask 24600
    %397 = vst.msk [vmem:[#allocation2] sm:$0x1] %vm396, %v385
    // Predicated region
    $region22: #{tpu_custom_call.1} parent=1 // pred_check
      _
    $region23: #{tpu_custom_call.1} parent=1 // pred_check_branch
      %399 = sbr.rel (0) target = $region25
    $region24: #{tpu_custom_call.1} parent=1 // pred_region
      %s401 = ssub.s32 16, 16
      %402 = vsyncadd [#allocation3], %s401
      %s404 = sshll.u32 [#allocation2], 4
      %s405 = int_to_ptr.vmem [resolvable:$true] %s404
      %407 = dma.vmem_to_hbm [thread:$0]  %s405, 16, %s5, [#allocation3]
    $region25: #{tpu_custom_call.1} parent=1 // pred_fallthru
      _
    // Predicated region
    $region26: #{tpu_custom_call.1} parent=1 // pred_check
      _
    $region27: #{tpu_custom_call.1} parent=1 // pred_check_branch
      %409 = sbr.rel (0) target = $region29
    $region28: #{tpu_custom_call.1} parent=1 // pred_region
      %410 = dma.done [#allocation3], 16
    $region29: #{tpu_custom_call.1} parent=1 // pred_fallthru
      _
    %411 = vsyncpa [#allocation3], 1

</llo_original>
